<compile_context>
chip_gen: v5e
topology: v5e:2x2
jax: 0.10.0
libtpu: 0.0.40
codegen_flags: <defaults>
</compile_context>

<pallas_src>
import functools

import jax
import jax.numpy as jnp
from jax.experimental import pallas as pl
from jax.experimental.pallas import tpu as pltpu


def _round_up(x, m):
    return (x + m - 1) // m * m


def _make_focal_kernel(alpha, gamma):
    alpha = float(alpha)
    gamma = float(gamma)
    gamma_is_int = gamma >= 0.0 and gamma == int(gamma)

    def focal_kernel(logits_ref, targets_ref, out_ref):
        x = logits_ref[...].astype(jnp.float32)            # (block_n, C)
        tgt = targets_ref[...]                              # (block_n, 1) i32

        # Numerically stable log-softmax pieces.
        m = jnp.max(x, axis=-1, keepdims=True)              # (block_n, 1)
        shifted = x - m
        sum_exp = jnp.sum(jnp.exp(shifted), axis=-1, keepdims=True)
        log_sum_exp = jnp.log(sum_exp)                       # (block_n, 1)

        # Target-class shifted logit via lane-iota select (reuses `shifted`).
        col = jax.lax.broadcasted_iota(jnp.int32, x.shape, 1)
        tgt_shifted = jnp.sum(jnp.where(col == tgt, shifted, 0.0),
                              axis=-1, keepdims=True)        # (block_n, 1)

        # ce = logsumexp(x) - x[target]  (the +m terms cancel).
        ce = log_sum_exp - tgt_shifted                        # (block_n, 1)
        pt = jnp.exp(-ce)
        omp = jnp.maximum(1.0 - pt, 0.0)                     # clamp fp rounding

        if gamma_is_int:
            fw = jnp.ones_like(omp)
            for _ in range(int(gamma)):                       # exact VPU muls
                fw = fw * omp
        else:
            fw = omp ** jnp.float32(gamma)

        out_ref[...] = jnp.float32(alpha) * fw * ce           # (block_n, 1)

    return focal_kernel


@functools.partial(jax.jit, static_argnames=("alpha", "gamma", "reduction"))
def focal_loss(logits, targets, alpha=1.0, gamma=2.0, reduction="mean"):
    """logits: (N, C) float (any float dtype), targets: (N,) int.

    Returns scalar f32 for 'mean'/'sum', (N,) f32 for 'none'.
    """
    n, c = logits.shape
    itemsize = jnp.dtype(logits.dtype).itemsize

    # Lane footprint of one row (classes padded to 128 lanes inside VMEM).
    c_lanes = _round_up(max(c, 128), 128)

    # Row granule: keep packed-sublane dtypes (bf16 / int8-fp8) clean.
    granule = 8 if itemsize >= 4 else (16 if itemsize == 2 else 32)

    # Tile sized by bytes: ~4 MiB of f32-equivalent logits per tile, capped so
    # lane-padded (block_n, 1) temporaries stay cheap.
    target_bytes = 4 * 1024 * 1024
    block_n = target_bytes // (c_lanes * 4)
    block_n = max(granule, min(2048, (block_n // granule) * granule))
    block_n = min(block_n, _round_up(n, granule))

    grid = pl.cdiv(n, block_n)
    targets_2d = targets.astype(jnp.int32).reshape(n, 1)

    # VMEM budget: double-buffered native logits tile + f32 upcast temporaries
    # + lane-padded (block_n, 1) column buffers (targets, output, row scalars).
    tile_native = block_n * c_lanes * itemsize
    tile_f32 = block_n * c_lanes * 4
    col_f32 = block_n * 128 * 4
    vmem_est = 2 * tile_native + 5 * tile_f32 + 8 * col_f32 + (2 << 20)
    vmem_limit = int(min(max(vmem_est + (8 << 20), 32 << 20), 56 << 20))

    cost = pl.CostEstimate(
        flops=6 * n * c,
        transcendentals=n * c + 3 * n,
        bytes_accessed=n * c * itemsize + n * 4 + n * 4,
    )

    kernel = _make_focal_kernel(alpha, gamma)

    per_sample = pl.pallas_call(
        kernel,
        out_shape=jax.ShapeDtypeStruct((n, 1), jnp.float32),
        grid=(grid,),
        in_specs=[
            # Class axis = full array dim (no pad); batch axis tiled/ragged.
            pl.BlockSpec((block_n, c), lambda i: (i, 0)),     # logits tile
            pl.BlockSpec((block_n, 1), lambda i: (i, 0)),     # targets tile
        ],
        out_specs=pl.BlockSpec((block_n, 1), lambda i: (i, 0)),  # focal/sample
        compiler_params=pltpu.CompilerParams(
            dimension_semantics=("parallel",),                # v7x: both TCs
            vmem_limit_bytes=vmem_limit),
        cost_estimate=cost,
    )(logits, targets_2d)[:, 0]

    if reduction == "mean":
        return jnp.sum(per_sample) / jnp.float32(n)
    elif reduction == "sum":
        return jnp.sum(per_sample)
    else:  # 'none'
        return per_sample


if __name__ == "__main__":
    key = jax.random.PRNGKey(0)
    k_logits, k_tgt = jax.random.split(key)

    N, C = 8, 32  # batch=8, num_classes=32
    logits = jax.random.normal(k_logits, (N, C), dtype=jnp.float32)
    targets = jax.random.randint(k_tgt, (N,), 0, C, dtype=jnp.int32)

    loss = focal_loss(logits, targets, alpha=1.0, gamma=2.0, reduction="mean")
    loss = jax.block_until_ready(loss)

    # Pure-JAX reference (same math as the PyTorch module).
    log_probs = jax.nn.log_softmax(logits, axis=-1)
    ce_ref = -jnp.take_along_axis(log_probs, targets[:, None], axis=-1)[:, 0]
    pt_ref = jnp.exp(-ce_ref)
    focal_ref = 1.0 * (1.0 - pt_ref) ** 2.0 * ce_ref

    assert jnp.allclose(loss, jnp.mean(focal_ref), rtol=1e-5, atol=1e-5), (
        loss, jnp.mean(focal_ref))

    loss_sum = jax.block_until_ready(
        focal_loss(logits, targets, alpha=1.0, gamma=2.0, reduction="sum"))
    assert jnp.allclose(loss_sum, jnp.sum(focal_ref), rtol=1e-5, atol=1e-5), (
        loss_sum, jnp.sum(focal_ref))

    loss_none = jax.block_until_ready(
        focal_loss(logits, targets, alpha=1.0, gamma=2.0, reduction="none"))
    assert jnp.allclose(loss_none, focal_ref, rtol=1e-5, atol=1e-5), (
        loss_none, focal_ref)

    print("KERNEL_OK")
</pallas_src>

<mosaic_0001>
module attributes {stable_mosaic.version = 11 : i64} {
  func.func @focal_kernel(%arg0: i32, %arg1: memref<8x32xf32, #tpu.memory_space<vmem>>, %arg2: memref<8x1xi32, #tpu.memory_space<vmem>>, %arg3: memref<8x1xf32, #tpu.memory_space<vmem>>) attributes {dimension_semantics = [#tpu.dimension_semantics<parallel>], iteration_bounds = array<i64: 1>, scalar_prefetch = 0 : i64, scratch_operands = 0 : i64, tpu.core_type = #tpu.core_type<tc>, window_params = [{transform_indices = @transform_0, window_bounds = array<i64: 8, 32>}, {transform_indices = @transform_1, window_bounds = array<i64: 8, 1>}, {transform_indices = @transform_2, window_bounds = array<i64: 8, 1>}]} {
    %c0 = arith.constant 0 : index
    %c0_0 = arith.constant 0 : index
    %0 = vector.load %arg1[%c0, %c0_0] : memref<8x32xf32, #tpu.memory_space<vmem>>, vector<8x32xf32>
    %c0_1 = arith.constant 0 : index
    %c0_2 = arith.constant 0 : index
    %1 = vector.load %arg2[%c0_1, %c0_2] : memref<8x1xi32, #tpu.memory_space<vmem>>, vector<8x1xi32>
    %cst = arith.constant dense<0xFF800000> : vector<8xf32>
    %2 = vector.multi_reduction <maximumf>, %0, %cst [1] : vector<8x32xf32> to vector<8xf32>
    %3 = vector.shape_cast %2 : vector<8xf32> to vector<8x1xf32>
    %4 = vector.broadcast %3 : vector<8x1xf32> to vector<8x32xf32>
    %5 = arith.subf %0, %4 : vector<8x32xf32>
    %6 = math.exp %5 : vector<8x32xf32>
    %cst_3 = arith.constant dense<0.000000e+00> : vector<8xf32>
    %7 = vector.multi_reduction <add>, %6, %cst_3 [1] : vector<8x32xf32> to vector<8xf32>
    %8 = vector.shape_cast %7 : vector<8xf32> to vector<8x1xf32>
    %9 = math.log %8 : vector<8x1xf32>
    %10 = tpu.iota {dimensions = array<i32: 1>} : vector<8x32xi32>
    %11 = vector.broadcast %1 : vector<8x1xi32> to vector<8x32xi32>
    %12 = arith.cmpi eq, %10, %11 : vector<8x32xi32>
    %cst_4 = arith.constant 0.000000e+00 : f32
    %13 = vector.broadcast %cst_4 : f32 to vector<8x32xf32>
    %14 = arith.select %12, %5, %13 : vector<8x32xi1>, vector<8x32xf32>
    %cst_5 = arith.constant dense<0.000000e+00> : vector<8xf32>
    %15 = vector.multi_reduction <add>, %14, %cst_5 [1] : vector<8x32xf32> to vector<8xf32>
    %16 = vector.shape_cast %15 : vector<8xf32> to vector<8x1xf32>
    %17 = arith.subf %9, %16 : vector<8x1xf32>
    %cst_6 = arith.constant 0.000000e+00 : f32
    %18 = vector.broadcast %cst_6 : f32 to vector<8x1xf32>
    %19 = arith.subf %18, %17 : vector<8x1xf32>
    %20 = math.exp %19 : vector<8x1xf32>
    %cst_7 = arith.constant 1.000000e+00 : f32
    %21 = vector.broadcast %cst_7 : f32 to vector<8x1xf32>
    %22 = arith.subf %21, %20 : vector<8x1xf32>
    %cst_8 = arith.constant 0.000000e+00 : f32
    %23 = vector.broadcast %cst_8 : f32 to vector<8x1xf32>
    %24 = arith.maximumf %22, %23 : vector<8x1xf32>
    %cst_9 = arith.constant 1.000000e+00 : f32
    %25 = vector.broadcast %cst_9 : f32 to vector<8x1xf32>
    %26 = arith.mulf %25, %24 : vector<8x1xf32>
    %27 = arith.mulf %26, %24 : vector<8x1xf32>
    %cst_10 = arith.constant 1.000000e+00 : f32
    %28 = vector.broadcast %cst_10 : f32 to vector<8x1xf32>
    %29 = arith.mulf %28, %27 : vector<8x1xf32>
    %30 = arith.mulf %29, %17 : vector<8x1xf32>
    %c0_11 = arith.constant 0 : index
    %c0_12 = arith.constant 0 : index
    %31 = vector.load %arg3[%c0_11, %c0_12] : memref<8x1xf32, #tpu.memory_space<vmem>>, vector<8x1xf32>
    tpu.vector_store %arg3[%c0_11, %c0_12], %30 {strides = array<i32>} : memref<8x1xf32, #tpu.memory_space<vmem>>, vector<8x1xf32>,
    return
  }
  func.func @transform_0(%arg0: i32) -> (i32, i32) {
    %c0_i32 = arith.constant 0 : i32
    %c0_i32_0 = arith.constant 0 : i32
    return %arg0, %c0_i32 : i32, i32
  }
  func.func @transform_1(%arg0: i32) -> (i32, i32) {
    %c0_i32 = arith.constant 0 : i32
    %c0_i32_0 = arith.constant 0 : i32
    return %arg0, %c0_i32 : i32, i32
  }
  func.func @transform_2(%arg0: i32) -> (i32, i32) {
    %c0_i32 = arith.constant 0 : i32
    %c0_i32_0 = arith.constant 0 : i32
    return %arg0, %c0_i32 : i32, i32
  }
}

</mosaic_0001>

<llo_original>
// kernel: focal_loss.1
$region0: #{focal_loss.1}
  #allocation0 [shape = 'u32[]', space=smem, size = 0x4, offset = 0x4, fixed_abs, tag = 'smem constant byte address 0x4 - core index']
  #allocation1 [shape = 'u32[72,128]{1,0:T(1,128)}', space=vmem, size = 0x9000, scoped, tag = 'internal scratch']
  %s0 = inlined_call_operand.vmem [shape: f32[8,32], index: 0, kind: input, shape index: {}]
  %s1 = inlined_call_operand.vmem [shape: s32[8,1], index: 1, kind: input, shape index: {}]
  %s2 = inlined_call_operand.vmem [shape: f32[8,1], index: 2, kind: output, shape index: {}]
  %s3 = sld [smem:[#allocation0]]
  $region18: #{focal_loss.1} parent=0
    _
  %s5 = ssub.s32 1, %s3
  %s6 = scalar_select 0, %s5, %s3
  // Predicated region
  $region2: #{focal_loss.1} parent=0 // pred_check
    _
  $region3: #{focal_loss.1} parent=0 // pred_check_branch
    %8 = sbr.rel (0) target = $region5
  $region4: #{focal_loss.1} parent=0 // pred_region
    _
  $region5: #{focal_loss.1} parent=0 // pred_fallthru
    _
  // Predicated region
  $region6: #{focal_loss.1} parent=0 // pred_check
    _
  $region7: #{focal_loss.1} parent=0 // pred_check_branch
    %10 = sbr.rel (0) target = $region9
  $region8: #{focal_loss.1} parent=0 // pred_region
    _
  $region9: #{focal_loss.1} parent=0 // pred_fallthru
    _
  %v11 = vld [vmem:[%s0] sm:$0xff]
  %v12 = vld [vmem:[%s1] sm:$0xff]
  %vm13 = vcmask 261120
  %v14 = vsel %vm13, %v11, -inf
  %15 = vmax.xlane.f32.xlu0 %v14
  %v16 = vpop.xlane.xlu0 %15
  %v17 = vsub.f32 %v11, %v16
  %v18 = vmul.f32 %v17, 1.442695
  %v19 = vpow.pop %v18
  %v20 = vsel %vm13, %v19, 0.0
  %21 = vadd.xlane.f32.xlu0 %v20
  %v22 = vpop.xlane.xlu0 %21
  %v23 = vlog2.pop %v22
  %v24 = vmul.f32 %v23, 0.6931472
  %v25 = vlaneseq
  %v26 = vand.u32 %v25, 127
  %27 = vset.pattern.permute.xlu0 0
  %28 = vperm.xlu0 %27, %v12
  %v29 = vpop.permute.xlu0 %28
  %vm30 = vcmp.eq.s32.totalorder %v26, %v29
  %v31 = vsel %vm30, %v17, 0.0
  %v32 = vsel %vm13, %v31, 0.0
  %33 = vadd.xlane.f32.xlu0 %v32
  %v34 = vpop.xlane.xlu0 %33
  %v35 = vsub.f32 %v24, %v34
  %v36 = vsub.f32 0.0, %v35
  %v37 = vmul.f32 %v36, 1.442695
  %v38 = vpow.pop %v37
  %v39 = vsub.f32 1.0, %v38
  %v40 = vmax.f32 %v39, 0.0
  %v41 = vmul.f32 %v40, %v40
  %v42 = vmul.f32 %v41, %v35
  %vm43 = vcmask 7168
  %44 = vst.msk [vmem:[%s2] sm:$0xff] %vm43, %v42
  // Predicated region
  $region10: #{focal_loss.1} parent=0 // pred_check
    _
  $region11: #{focal_loss.1} parent=0 // pred_check_branch
    %46 = sbr.rel (0) target = $region13
  $region12: #{focal_loss.1} parent=0 // pred_region
    _
  $region13: #{focal_loss.1} parent=0 // pred_fallthru
    _
  // Predicated region
  $region14: #{focal_loss.1} parent=0 // pred_check
    _
  $region15: #{focal_loss.1} parent=0 // pred_check_branch
    %48 = sbr.rel (0) target = $region17
  $region16: #{focal_loss.1} parent=0 // pred_region
    _
  $region17: #{focal_loss.1} parent=0 // pred_fallthru
    _

</llo_original>
